<compile_context>
chip_gen: v7x
topology: tpu7x:2x2x1
jax: 0.10.0
libtpu: 0.0.40
codegen_flags: <defaults>
</compile_context>

<pallas_src>
import functools

import jax
import jax.numpy as jnp
from jax.experimental import pallas as pl
from jax.experimental.pallas import tpu as pltpu


# ---------------------------------------------------------------------------
# Kernel 1: masked partial sums over L, NCL layout.
#   grid = (n_split, B, tiles_per_split)  -> ("parallel", "parallel", "arbitrary")
#   x_ref: (1, Cin, lt)     s_ref: (1, 1, Cin, 1)  (resident across the l axis)
# The split axis exists so B == 1 (streaming inference) still uses both
# TensorCores on v7x for this pure HBM-streaming reduce.
# ---------------------------------------------------------------------------
def _pool_kernel(x_ref, s_ref, *, lt, tiles_per_split, length):
    l = pl.program_id(2)

    @pl.when(l == 0)
    def _():
        s_ref[...] = jnp.zeros_like(s_ref)

    # Mask the (possibly ragged) last L tile: padded lanes hold undefined data.
    start = (pl.program_id(0) * tiles_per_split + l) * lt
    pos = start + jax.lax.broadcasted_iota(jnp.int32, x_ref.shape, x_ref.ndim - 1)
    xv = jnp.where(pos < length, x_ref[...].astype(jnp.float32), 0.0)
    s_ref[...] += jnp.sum(xv, axis=-1, keepdims=True)[None]


# ---------------------------------------------------------------------------
# Kernel 2: 1x1 conv + channel attention scale, NCL layout (lane axis = L).
#   x_ref: (1, Cin, Lt)   w1_ref: (Cout, Cin)   b1_ref: (Cout, 1)
#   a_ref: (1, Cout, 1)   o_ref: (1, Cout, Lt)
# ---------------------------------------------------------------------------
def _scale_kernel(x_ref, w1_ref, b1_ref, a_ref, o_ref, *, compute_dtype):
    # In-kernel cast (VPU, hidden under the DMA) -- avoids a wrapper-side full
    # HBM round trip of x just to change dtype.
    x = x_ref[0].astype(compute_dtype)                                   # (Cin, Lt)
    y = jnp.dot(w1_ref[...], x, preferred_element_type=jnp.float32)      # (Cout, Lt), f32 acc
    y = y + b1_ref[...]                                                  # bias bcast over L
    # TODO(synk): nn.Dropout is identity in eval/inference mode; training-mode
    # stochastic masking (pltpu.prng_seed/prng_random_bits) intentionally omitted.
    o_ref[0] = (y * a_ref[0]).astype(o_ref.dtype)                        # channel scale


def _vmem_capacity_bytes():
    """Best-effort per-TensorCore VMEM capacity query."""
    try:
        return int(pltpu.get_tpu_info().vmem_capacity_bytes)
    except Exception:
        pass
    try:
        if "v7" in jax.devices()[0].device_kind.lower():
            return 64 << 20
    except Exception:
        pass
    return 128 << 20


def _pick_l_tile(length, per_l_bytes, budget_bytes):
    """Largest 128-multiple L tile whose pipelined x+out tiles fit `budget_bytes`.
    Tiles need not divide L: the ragged last tile is masked in the pool kernel,
    and kernel 2's out-of-bounds output lanes are dropped on writeback."""
    max_lt = (budget_bytes // max(per_l_bytes, 1)) // 128 * 128
    max_lt = max(max_lt, 128)
    return length if length <= max_lt else max_lt


def se_module_pallas(x_ncl, params, *, compute_dtype=None, out_dtype=None,
                     vmem_tile_budget=None):
    """x_ncl: (B, Cin, L). Returns (B, Cout, L) in `out_dtype` (default x dtype)."""
    w1, b1, wf1, bf1, wg, bg, wf2, bf2 = params  # PyTorch layouts: weights are [out, in]
    B, Cin, L = x_ncl.shape
    Cout = w1.shape[0]
    out_dtype = out_dtype if out_dtype is not None else x_ncl.dtype
    cdt = compute_dtype if compute_dtype is not None else x_ncl.dtype

    # w1 is tiny (Cout x Cin); casting it in the wrapper is negligible traffic.
    # x is NOT cast in the wrapper -- kernels cast it on the fly.
    w1_c = w1.astype(cdt)

    # -------- generation-aware VMEM budget -----------------------------------
    cap = _vmem_capacity_bytes()
    if cap <= (96 << 20):                 # v7x-class part: 64 MiB VMEM per TC
        default_tile_budget = 14 << 20
        limit_cap = 38 << 20
    else:                                 # v5e / v6e: 128 MiB VMEM
        default_tile_budget = 48 << 20
        limit_cap = 80 << 20
    if vmem_tile_budget is None:
        vmem_tile_budget = default_tile_budget

    in_sz = jnp.dtype(x_ncl.dtype).itemsize
    out_sz = jnp.dtype(out_dtype).itemsize
    # x2 = pipeline double-buffering of the streamed x and out tiles.
    per_l_bytes = 2 * (Cin * in_sz + Cout * out_sz)
    lt = _pick_l_tile(L, per_l_bytes, vmem_tile_budget)
    n_l = pl.cdiv(L, lt)

    tiles_bytes = lt * per_l_bytes        # already includes the x2 pipelining factor
    invariant_bytes = 2 * (Cout * Cin * jnp.dtype(cdt).itemsize     # w1 (default double-buffer)
                           + Cout * 4 + Cout * 4 + Cin * 4)         # b1, a, pool accumulator
    vmem_limit = int(min(limit_cap,
                         max(32 << 20, tiles_bytes + invariant_bytes + (4 << 20))))

    # -------- Pass 1: partial sums of x over L -> (n_split, B, Cin, 1) -------
    # Split the L tiles two ways when B == 1 so both v7x TCs stream the reduce.
    n_split = 2 if (B == 1 and n_l >= 2 and n_l % 2 == 0) else 1
    tiles_per_split = n_l // n_split

    partial_sums = pl.pallas_call(
        functools.partial(_pool_kernel, lt=lt, tiles_per_split=tiles_per_split,
                          length=L),
        out_shape=jax.ShapeDtypeStruct((n_split, B, Cin, 1), jnp.float32),
        grid=(n_split, B, tiles_per_split),
        in_specs=[pl.BlockSpec((1, Cin, lt),
                               lambda s, b, l: (b, 0, s * tiles_per_split + l))],
        out_specs=pl.BlockSpec((1, 1, Cin, 1), lambda s, b, l: (s, b, 0, 0)),
        compiler_params=pltpu.CompilerParams(
            dimension_semantics=("parallel", "parallel", "arbitrary"),
            vmem_limit_bytes=vmem_limit),
    )(x_ncl)

    pooled_x = jnp.sum(partial_sums, axis=0) * (1.0 / L)          # (B, Cin, 1), f32

    # -------- Squeeze/excite FC chain in plain XLA (tiny M=1 matmuls) --------
    # By linearity of the 1x1 conv: mean_L(conv1(x)) == mean_L(x) @ w1^T + b1.
    pooled_y = pooled_x[:, :, 0] @ w1.T + b1                      # (B, Cout), f32
    h1 = jax.nn.relu(pooled_y @ wf1.T + bf1)
    g = jax.nn.relu(h1 @ wg.T + bg)
    a = jax.nn.relu(g @ wf2.T + bf2)                              # (B, Cout)
    a3 = a[:, :, None].astype(jnp.float32)                        # (B, Cout, 1)

    # -------- Pass 2: out = (w1 @ x + b1) * a, tiled over (B, L), all parallel
    out = pl.pallas_call(
        functools.partial(_scale_kernel, compute_dtype=cdt),
        out_shape=jax.ShapeDtypeStruct((B, Cout, L), out_dtype),
        grid=(B, n_l),
        in_specs=[
            pl.BlockSpec((1, Cin, lt), lambda b, l: (b, 0, l)),   # x tile (native dtype)
            pl.BlockSpec((Cout, Cin), lambda b, l: (0, 0)),       # conv1 weight (grid-invariant)
            pl.BlockSpec((Cout, 1), lambda b, l: (0, 0)),         # conv1 bias
            pl.BlockSpec((1, Cout, 1), lambda b, l: (b, 0, 0)),   # per-batch attention vector
        ],
        out_specs=pl.BlockSpec((1, Cout, lt), lambda b, l: (b, 0, l)),
        compiler_params=pltpu.CompilerParams(
            dimension_semantics=("parallel", "parallel"),
            vmem_limit_bytes=vmem_limit),
    )(x_ncl, w1_c, b1.reshape(Cout, 1).astype(jnp.float32), a3)

    return out


def se_module_ref(x_ncl, params):
    """Pure-JAX reference matching PyTorch eval-mode semantics (NCL layout)."""
    w1, b1, wf1, bf1, wg, bg, wf2, bf2 = params
    y = jnp.einsum("oc,bcl->bol", w1, x_ncl) + b1[None, :, None]  # conv1 (1x1)
    pooled = jnp.mean(y, axis=-1)                                 # AdaptiveAvgPool1d(1)
    h1 = jax.nn.relu(pooled @ wf1.T + bf1)
    g = jax.nn.relu(h1 @ wg.T + bg)
    a = jax.nn.relu(g @ wf2.T + bf2)
    return y * a[:, :, None]


def init_params(key, in_channels, out_channels, gating_reduction):
    cr = out_channels // gating_reduction
    ks = jax.random.split(key, 8)
    rnd = lambda k, shape: jax.random.normal(k, shape, jnp.float32) * 0.1
    w1 = rnd(ks[0], (out_channels, in_channels))    # PyTorch [out, in] layouts
    b1 = rnd(ks[1], (out_channels,))
    wf1 = rnd(ks[2], (out_channels, out_channels))
    bf1 = rnd(ks[3], (out_channels,))
    wg = rnd(ks[4], (cr, out_channels))
    bg = rnd(ks[5], (cr,))
    wf2 = rnd(ks[6], (out_channels, cr))
    bf2 = rnd(ks[7], (out_channels,))
    return (w1, b1, wf1, bf1, wg, bg, wf2, bf2)


if __name__ == "__main__":
    Cin, Cout = 8, 16
    gating_reduction = 4
    key = jax.random.PRNGKey(0)
    kx, kx2, kp = jax.random.split(key, 3)
    params = init_params(kp, Cin, Cout, gating_reduction)

    # Case 1: B=2, L=256 (single L tile), f32 end-to-end.
    x = jax.random.normal(kx, (2, Cin, 256), jnp.float32)
    ref = se_module_ref(x, params)
    out = jax.block_until_ready(se_module_pallas(x, params))
    assert out.shape == ref.shape and out.dtype == x.dtype, (out.shape, out.dtype)
    assert jnp.allclose(out, ref, atol=1e-4, rtol=1e-4), \
        float(jnp.max(jnp.abs(out - ref)))

    # Case 2: bf16 MXU operands + bf16 output (halves the dominant HBM write stream).
    out_bf16 = jax.block_until_ready(
        se_module_pallas(x, params, compute_dtype=jnp.bfloat16,
                         out_dtype=jnp.bfloat16))
    assert out_bf16.shape == ref.shape and out_bf16.dtype == jnp.bfloat16
    assert jnp.allclose(out_bf16.astype(jnp.float32), ref, atol=5e-2, rtol=5e-2), \
        float(jnp.max(jnp.abs(out_bf16.astype(jnp.float32) - ref)))

    # Case 3: B=1 with ragged L (200) and a tiny tile budget -> lt=128, two L
    # tiles: exercises the masked partial last tile and the 2-way pool split
    # (both TensorCores on v7x).
    x2 = jax.random.normal(kx2, (1, Cin, 200), jnp.float32)
    ref2 = se_module_ref(x2, params)
    tiny_budget = 128 * 2 * (Cin * 4 + Cout * 4)
    out2 = jax.block_until_ready(
        se_module_pallas(x2, params, vmem_tile_budget=tiny_budget))
    assert out2.shape == ref2.shape, out2.shape
    assert jnp.allclose(out2, ref2, atol=1e-4, rtol=1e-4), \
        float(jnp.max(jnp.abs(out2 - ref2)))

    print("KERNEL_OK")
</pallas_src>

<mosaic_0001>
module attributes {stable_mosaic.version = 11 : i64} {
  func.func @_pool_kernel(%arg0: i32, %arg1: i32, %arg2: i32, %arg3: memref<1x8x256xf32, #tpu.memory_space<vmem>>, %arg4: memref<1x1x8x1xf32, #tpu.memory_space<vmem>>) attributes {dimension_semantics = [#tpu.dimension_semantics<parallel>, #tpu.dimension_semantics<parallel>, #tpu.dimension_semantics<arbitrary>], iteration_bounds = array<i64: 1, 2, 1>, scalar_prefetch = 0 : i64, scratch_operands = 0 : i64, tpu.core_type = #tpu.core_type<tc>, window_params = [{transform_indices = @transform_0, window_bounds = array<i64: 1, 8, 256>}, {transform_indices = @transform_1, window_bounds = array<i64: 1, 1, 8, 1>}]} {
    %c0_i32 = arith.constant 0 : i32
    %0 = arith.cmpi eq, %arg2, %c0_i32 : i32
    %1 = arith.extui %0 : i1 to i32
    %c0_i32_0 = arith.constant 0 : i32
    %2 = arith.cmpi ne, %1, %c0_i32_0 : i32
    scf.if %2 {
      %cst_13 = arith.constant 0.000000e+00 : f32
      %20 = vector.broadcast %cst_13 : f32 to vector<1x1x8x1xf32>
      %c0_14 = arith.constant 0 : index
      %c0_15 = arith.constant 0 : index
      %c0_16 = arith.constant 0 : index
      %c0_17 = arith.constant 0 : index
      %21 = vector.load %arg4[%c0_14, %c0_15, %c0_16, %c0_17] : memref<1x1x8x1xf32, #tpu.memory_space<vmem>>, vector<1x1x8x1xf32>
      tpu.vector_store %arg4[%c0_14, %c0_15, %c0_16, %c0_17], %20 {strides = array<i32>} : memref<1x1x8x1xf32, #tpu.memory_space<vmem>>, vector<1x1x8x1xf32>,
    } else {
    }
    %c1_i32 = arith.constant 1 : i32
    %3 = arith.muli %arg0, %c1_i32 : i32
    %4 = arith.addi %3, %arg2 : i32
    %c256_i32 = arith.constant 256 : i32
    %5 = arith.muli %4, %c256_i32 : i32
    %6 = tpu.iota {dimensions = array<i32: 2>} : vector<1x8x256xi32>
    %7 = vector.broadcast %5 : i32 to vector<1x8x256xi32>
    %8 = arith.addi %7, %6 : vector<1x8x256xi32>
    %c256_i32_1 = arith.constant 256 : i32
    %9 = vector.broadcast %c256_i32_1 : i32 to vector<1x8x256xi32>
    %10 = arith.cmpi slt, %8, %9 : vector<1x8x256xi32>
    %c0 = arith.constant 0 : index
    %c0_2 = arith.constant 0 : index
    %c0_3 = arith.constant 0 : index
    %11 = vector.load %arg3[%c0, %c0_2, %c0_3] : memref<1x8x256xf32, #tpu.memory_space<vmem>>, vector<1x8x256xf32>
    %cst = arith.constant 0.000000e+00 : f32
    %12 = vector.broadcast %cst : f32 to vector<1x8x256xf32>
    %13 = arith.select %10, %11, %12 : vector<1x8x256xi1>, vector<1x8x256xf32>
    %c0_4 = arith.constant 0 : index
    %c0_5 = arith.constant 0 : index
    %c0_6 = arith.constant 0 : index
    %c0_7 = arith.constant 0 : index
    %14 = vector.load %arg4[%c0_4, %c0_5, %c0_6, %c0_7] : memref<1x1x8x1xf32, #tpu.memory_space<vmem>>, vector<1x1x8x1xf32>
    %cst_8 = arith.constant dense<0.000000e+00> : vector<1x8xf32>
    %15 = vector.multi_reduction <add>, %13, %cst_8 [2] : vector<1x8x256xf32> to vector<1x8xf32>
    %16 = vector.shape_cast %15 : vector<1x8xf32> to vector<1x8x1xf32>
    %17 = vector.shape_cast %16 : vector<1x8x1xf32> to vector<1x1x8x1xf32>
    %18 = arith.addf %14, %17 : vector<1x1x8x1xf32>
    %c0_9 = arith.constant 0 : index
    %c0_10 = arith.constant 0 : index
    %c0_11 = arith.constant 0 : index
    %c0_12 = arith.constant 0 : index
    %19 = vector.load %arg4[%c0_9, %c0_10, %c0_11, %c0_12] : memref<1x1x8x1xf32, #tpu.memory_space<vmem>>, vector<1x1x8x1xf32>
    tpu.vector_store %arg4[%c0_9, %c0_10, %c0_11, %c0_12], %18 {strides = array<i32>} : memref<1x1x8x1xf32, #tpu.memory_space<vmem>>, vector<1x1x8x1xf32>,
    return
  }
  func.func @transform_0(%arg0: i32, %arg1: i32, %arg2: i32) -> (i32, i32, i32) {
    %c1_i32 = arith.constant 1 : i32
    %0 = arith.muli %arg0, %c1_i32 : i32
    %1 = arith.addi %0, %arg2 : i32
    %c0_i32 = arith.constant 0 : i32
    %c0_i32_0 = arith.constant 0 : i32
    return %arg1, %c0_i32, %1 : i32, i32, i32
  }
  func.func @transform_1(%arg0: i32, %arg1: i32, %arg2: i32) -> (i32, i32, i32, i32) {
    %c0_i32 = arith.constant 0 : i32
    %c0_i32_0 = arith.constant 0 : i32
    %c0_i32_1 = arith.constant 0 : i32
    return %arg0, %arg1, %c0_i32, %c0_i32_0 : i32, i32, i32, i32
  }
}

</mosaic_0001>

<llo_original>
// kernel: tpu_custom_call.1
$region0: #{tpu_custom_call.1}
  #allocation0 [shape = 'u32[]', space=smem, size = 0x4, offset = 0x4, fixed_abs, tag = 'smem constant byte address 0x4 - core index']
  #allocation1 [shape = 'u32[144,128]{1,0:T(1,128)}', space=vmem, size = 0x12000, scoped, tag = 'internal scratch']
  %s0 = inlined_call_operand.hbm [shape: f32[2,8,256], index: 0, kind: input, shape index: {}]
  %s1 = inlined_call_operand.vmem [shape: f32[1,2,8,1], index: 1, kind: output, shape index: {}]
  %s2 = sld [smem:[#allocation0]]
  $region45: #{tpu_custom_call.1} parent=0
    _
  %s4 = ssub.s32 1, %s2
  %s5 = scalar_select 0, %s4, %s2
  $region1: #{tpu_custom_call.1} parent=0
    #allocation2 [shape = 'u8[16384]{0}', space=vmem, size = 0x4000, scoped, tag = 'input window, operand 0']
    #allocation3 [shape = 's32[2]{0}', space=sflag, size = 0x8, scoped, tag = 'scoped memory for tpu_custom_call.1']
    %6 = vsyncpa [#allocation3], 0
    %s7 = scalar_lea.sflag [#allocation3], 1
    %8 = vsyncpa %s7, 0
    loop: start=0, step=1, limit=4
    $region2: #{tpu_custom_call.1} parent=1 // loop_pre_header
      _
    $region3: #{tpu_custom_call.1} parent=1 // loop_header
      %s10 = sphi 0, %s14
      %p11 = scmp.ge.s32.totalorder %s10, 4
      %s17 = sphi 0, %s36
      %s18 = sphi 0, %s32
      %s19 = sphi 0, %s28
      %s20 = sphi 0, %s17
      %s21 = sphi 0, %s18
      %s22 = sphi 0, %s19
      %s23 = sphi 0, %s20
      %s24 = sphi 0, %s21
      %s25 = sphi 0, %s22
      %s43 = sphi 0, %s45
      %s46 = sphi 0, %s43
      %s47 = sphi 0, %s46
      %s63 = sphi 0, %s47
      %s71 = sphi 0, %s73
      %s74 = sphi 0, %s71
      %s75 = sphi 0, %s74
      %s91 = sphi 0, %s75
    $region4: #{tpu_custom_call.1} parent=1 // loop_header_branch
      %13 = sbr.rel (%p11) target = $region8
    $region5: #{tpu_custom_call.1} parent=1 // loop_body
      %s15 = ssub.s32 %s10, 1
      %s16 = ssub.s32 %s10, 2
      %s26 = sadd.s32 1, %s19
      %p27 = scmp.ge.s32.totalorder %s26, 1
      %s28 = scalar_select %p27, 0, %s26
      %s29 = sadd.s32 1, %s18
      %s30 = scalar_select %p27, %s29, %s18
      %p31 = scmp.ge.s32.totalorder %s30, 2
      %s32 = scalar_select %p31, 0, %s30
      %s33 = sadd.s32 1, %s17
      %s34 = scalar_select %p31, %s33, %s17
      %p35 = scmp.ge.s32.totalorder %s34, 1
      %s36 = scalar_select %p35, 0, %s34
      %s37 = sadd.s32 %s17, %s19
      %s38 = sadd.s32 %s36, %s28
      %s39 = ssub.s32 %s18, %s32
      %s40 = ssub.s32 %s37, %s38
      %s41 = sor.u32 %s39, %s40
      %p42 = scmp.eq.s32.totalorder %s41, 0
      %s44 = sadd.s32 %s43, 1
      %s45 = scalar_select %p42, %s43, %s44
      %p48 = pneg %p42
      %p49 = scmp.eq.s32.totalorder %s10, 1
      %p50 = por %p48, %p49
      %p51 = scmp.ne.s32.totalorder %s43, %s46
      %p52 = scmp.eq.s32.totalorder %s10, 0
      %p53 = por %p51, %p52
      %p54 = scmp.ne.s32.totalorder %s43, %s46
      %p55 = scmp.eq.s32.totalorder %s15, 1
      %p56 = por %p54, %p55
      %p57 = scmp.ne.s32.totalorder %s46, %s47
      %p58 = scmp.eq.s32.totalorder %s15, 0
      %p59 = por %p57, %p58
      %p60 = scmp.ne.s32.totalorder %s46, %s47
      %p61 = scmp.eq.s32.totalorder %s16, 1
      %p62 = por %p60, %p61
      %p64 = scmp.ne.s32.totalorder %s47, %s63
      %p65 = scmp.eq.s32.totalorder %s16, 0
      %p66 = por %p64, %p65
      %s67 = ssub.s32 %s17, %s36
      %s68 = ssub.s32 %s18, %s32
      %s69 = sor.u32 %s67, %s68
      %p70 = scmp.eq.s32.totalorder %s69, 0
      %s72 = sadd.s32 %s71, 1
      %s73 = scalar_select %p70, %s71, %s72
      %p76 = pneg %p70
      %p77 = scmp.eq.s32.totalorder %s10, 1
      %p78 = por %p76, %p77
      %p79 = scmp.ne.s32.totalorder %s71, %s74
      %p80 = scmp.eq.s32.totalorder %s10, 0
      %p81 = por %p79, %p80
      %p82 = scmp.ne.s32.totalorder %s71, %s74
      %p83 = scmp.eq.s32.totalorder %s15, 1
      %p84 = por %p82, %p83
      %p85 = scmp.ne.s32.totalorder %s74, %s75
      %p86 = scmp.eq.s32.totalorder %s15, 0
      %p87 = por %p85, %p86
      %p88 = scmp.ne.s32.totalorder %s74, %s75
      %p89 = scmp.eq.s32.totalorder %s16, 1
      %p90 = por %p88, %p89
      %p92 = scmp.ne.s32.totalorder %s75, %s91
      %p93 = scmp.eq.s32.totalorder %s16, 0
      %p94 = por %p92, %p93
      %p95 = scmp.le.s32.totalorder 1, %s10
      %p96 = scmp.lt.s32.totalorder %s10, 3
      %p97 = pnand %p95, %p96
      %p98 = pneg %p97
      // Predicated region
      $region9: #{tpu_custom_call.1} parent=5 // pred_check
        _
      $region10: #{tpu_custom_call.1} parent=5 // pred_check_branch
        %100 = sbr.rel (%p97) target = $region12
      $region11: #{tpu_custom_call.1} parent=5 // pred_region
        %s101 = ssub.s32 %s10, 1
      $region12: #{tpu_custom_call.1} parent=5 // pred_fallthru
        _
      %p102 = scmp.lt.s32.totalorder %s10, 2
      // Predicated region
      $region13: #{tpu_custom_call.1} parent=5 // pred_check
        %p103 = pneg %p102
      $region14: #{tpu_custom_call.1} parent=5 // pred_check_branch
        %105 = sbr.rel (%p103) target = $region16
      $region15: #{tpu_custom_call.1} parent=5 // pred_region
        // Predicated region
        $region17: #{tpu_custom_call.1} parent=15 // pred_check
          %p106 = pneg %p53
        $region18: #{tpu_custom_call.1} parent=15 // pred_check_branch
          %108 = sbr.rel (%p106) target = $region20
        $region19: #{tpu_custom_call.1} parent=15 // pred_region
          %s109 = sand.u32 %s43, 1
          %s110 = scalar_lea.sflag [#allocation3], %s109
          %s111 = sand.u32 %s43, 1
          %s112 = smul.addr %s111, 16
          %s113 = scalar_lea.vmem [#allocation2], %s112
          %s114 = sadd.s32 %s17, %s19
          %s115 = smul.u32 2, %s114
          %s117 = ssub.s32 256, 256
          %118 = vsyncadd %s110, %s117
          %s119 = smul.addr %s18, 2
          %s120 = sadd.s32 %s115, %s119
          %s121 = smul.addr %s120, 128
          %s122 = scalar_lea.hbm %s0, %s121
          %s124 = sshll.u32 %s113, 4
          %s125 = int_to_ptr.vmem [resolvable:$true] %s124
          %127 = dma.hbm_to_vmem [thread:$0]  %s122, 256, %s125, %s110
        $region20: #{tpu_custom_call.1} parent=15 // pred_fallthru
          _
      $region16: #{tpu_custom_call.1} parent=5 // pred_fallthru
        _
      %p128 = scmp.le.s32.totalorder 1, %s10
      %p129 = scmp.lt.s32.totalorder %s10, 3
      %p130 = pnand %p128, %p129
      %p131 = pneg %p130
      // Predicated region
      $region21: #{tpu_custom_call.1} parent=5 // pred_check
        _
      $region22: #{tpu_custom_call.1} parent=5 // pred_check_branch
        %133 = sbr.rel (%p130) target = $region24
      $region23: #{tpu_custom_call.1} parent=5 // pred_region
        %s134 = ssub.s32 %s10, 1
        %s135 = sand.u32 %s46, 1
        %s136 = scalar_lea.sflag [#allocation3], %s135
        %s137 = sand.u32 %s46, 1
        %s138 = smul.addr %s137, 16
        %s139 = scalar_lea.vmem [#allocation2], %s138
        // Predicated region
        $region25: #{tpu_custom_call.1} parent=23 // pred_check
          %p140 = pneg %p59
        $region26: #{tpu_custom_call.1} parent=23 // pred_check_branch
          %142 = sbr.rel (%p140) target = $region28
        $region27: #{tpu_custom_call.1} parent=23 // pred_region
          %143 = dma.done %s136, 256
        $region28: #{tpu_custom_call.1} parent=23 // pred_fallthru
          _
        %s144 = sand.u32 %s46, 1
        %s145 = scalar_lea.sflag [#allocation3], %s144
        %s146 = sand.u32 %s46, 1
        %s147 = smul.addr %s146, 16
        %s148 = scalar_lea.vmem [#allocation2], %s147
        %p149 = pneg %p59
        %p150 = pneg %p56
        %p151 = pneg %p87
        %p152 = pneg %p84
        %p153 = scmp.lt.s32.totalorder %s20, 0
        %s154 = scalar_select %p153, %s20, 0
        %p155 = scmp.lt.s32.totalorder %s21, 1
        %s156 = scalar_select %p155, %s21, 1
        %s157 = smul.addr %s154, 2
        %s158 = sadd.s32 %s156, %s157
        %s159 = smul.addr %s158, 8
        %s160 = scalar_lea.vmem %s1, %s159
        %s161 = sadd.s32 %s20, %s22
        %s162 = smul.u32 2, %s161
        %p163 = scmp.lt.s32.totalorder %s20, 0
        %s164 = scalar_select %p163, %s20, 0
        %p165 = scmp.lt.s32.totalorder %s21, 1
        %s166 = scalar_select %p165, %s21, 1
        %s167 = smul.addr %s164, 2
        %s168 = sadd.s32 %s166, %s167
        %s169 = smul.addr %s168, 8
        %s170 = scalar_lea.vmem %s1, %s169
        %p171 = scmp.eq.s32.totalorder %s22, 0
        // Predicated region
        $region29: #{tpu_custom_call.1} parent=23 // pred_check
          %p172 = pneg %p171
        $region30: #{tpu_custom_call.1} parent=23 // pred_check_branch
          %174 = sbr.rel (%p172) target = $region32
        $region31: #{tpu_custom_call.1} parent=23 // pred_region
          %vm175 = vcmask 7168
          %176 = vst.msk [vmem:[%s170] sm:$0xff] %vm175, 0.0
        $region32: #{tpu_custom_call.1} parent=23 // pred_fallthru
          _
        %s177 = sadd.s32 %s20, %s22
        %s178 = smul.u32 %s177, 256
        %v179 = vlaneseq
        %v180 = vand.u32 %v179, 127
        %v181 = vadd.s32 %v180, 128
        %v182 = vstv %s178
        %v183 = vadd.s32 %v182, %v180
        %v184 = vadd.s32 %v182, %v181
        %vm185 = vcmp.lt.s32.totalorder %v183, 256
        %vm186 = vcmp.lt.s32.totalorder %v184, 256
        %v187 = vld [vmem:[%s139] sm:$0xff]
        %v188 = vld [vmem:[%s139 + $0x8] sm:$0xff]
        %v189 = vsel %vm185, %v187, 0.0
        %v190 = vsel %vm186, %v188, 0.0
        %v191 = vld [vmem:[%s170] sm:$0xff]
        %v192 = vadd.f32 %v189, %v190
        %193 = vadd.xlane.f32.xlu0 %v192
        %v194 = vpop.xlane.xlu0 %193
        %v195 = vadd.f32 %v191, %v194
        %vm196 = vcmask 7168
        %197 = vst.msk [vmem:[%s170] sm:$0xff] %vm196, %v195
        %p198 = scmp.lt.s32.totalorder %s20, 0
        %s199 = scalar_select %p198, %s20, 0
        %p200 = scmp.lt.s32.totalorder %s21, 1
        %s201 = scalar_select %p200, %s21, 1
        %s202 = smul.addr %s199, 2
        %s203 = sadd.s32 %s201, %s202
        %s204 = smul.addr %s203, 8
        %s205 = scalar_lea.vmem %s1, %s204
        // Predicated region
        $region33: #{tpu_custom_call.1} parent=23 // pred_check
          %p206 = pneg %p84
        $region34: #{tpu_custom_call.1} parent=23 // pred_check_branch
          %208 = sbr.rel (%p206) target = $region36
        $region35: #{tpu_custom_call.1} parent=23 // pred_region
          _
        $region36: #{tpu_custom_call.1} parent=23 // pred_fallthru
          _
      $region24: #{tpu_custom_call.1} parent=5 // pred_fallthru
        _
      %p209 = scmp.le.s32.totalorder 2, %s10
      // Predicated region
      $region37: #{tpu_custom_call.1} parent=5 // pred_check
        %p210 = pneg %p209
      $region38: #{tpu_custom_call.1} parent=5 // pred_check_branch
        %212 = sbr.rel (%p210) target = $region40
      $region39: #{tpu_custom_call.1} parent=5 // pred_region
        %s213 = ssub.s32 %s10, 2
        // Predicated region
        $region41: #{tpu_custom_call.1} parent=39 // pred_check
          %p214 = pneg %p90
        $region42: #{tpu_custom_call.1} parent=39 // pred_check_branch
          %216 = sbr.rel (%p214) target = $region44
        $region43: #{tpu_custom_call.1} parent=39 // pred_region
          %p217 = scmp.lt.s32.totalorder %s23, 0
          %s218 = scalar_select %p217, %s23, 0
          %p219 = scmp.lt.s32.totalorder %s24, 1
          %s220 = scalar_select %p219, %s24, 1
          %s221 = smul.addr %s218, 2
          %s222 = sadd.s32 %s220, %s221
          %s223 = smul.addr %s222, 8
          %s224 = scalar_lea.vmem %s1, %s223
        $region44: #{tpu_custom_call.1} parent=39 // pred_fallthru
          _
      $region40: #{tpu_custom_call.1} parent=5 // pred_fallthru
        _
    $region6: #{tpu_custom_call.1} parent=1 // loop_footer
      %s14 = sadd.s32 1, %s10
    $region7: #{tpu_custom_call.1} parent=1 // loop_footer_branch
      %9 = sbr.rel target = $region3
    $region8: #{tpu_custom_call.1} parent=1 // loop_exit
      _
    %225 = vsyncpa [#allocation3], 1
    %s226 = scalar_lea.sflag [#allocation3], 1
    %227 = vsyncpa %s226, 1

</llo_original>
